<compile_context>
chip_gen: v5e
topology: v5e:2x2
jax: 0.10.0
libtpu: 0.0.40
codegen_flags: <defaults>
</compile_context>

<pallas_src>
import functools

import jax
import jax.numpy as jnp
import numpy as np
from jax.experimental import pallas as pl
from jax.experimental.pallas import tpu as pltpu


def _round_up(v: int, m: int) -> int:
    return ((v + m - 1) // m) * m


def _default_tile_bytes() -> int:
    # Per-step input-tile target: big enough to amortize the ~0.35us/step overhead
    # against HBM bandwidth, small enough to double-buffer inside scoped VMEM.
    try:
        kind = jax.devices()[0].device_kind.lower()
    except Exception:
        kind = ""
    if "v5" in kind:
        return 6 * 1024 * 1024
    if "v6" in kind:
        return 8 * 1024 * 1024
    return 10 * 1024 * 1024          # v7x & newer: fastest HBM, largest tiles pay off


def _pooling_matrix(tho: int, wo: int, k: int) -> np.ndarray:
    # 0/1 matrix mapping a flattened (tho*k, wo*k) spatial chunk (row-major H, W) to its
    # tho*wo pooled outputs: row f = hh*(wo*k) + w  ->  col (hh // k) * wo + (w // k).
    wc = wo * k
    f = np.arange(tho * k * wc)
    col = (f // (k * wc)) * wo + (f % wc) // k
    q = np.zeros((f.size, tho * wo), np.float32)
    q[f, col] = 1.0
    return q


def _avgpool3d_kernel(q_ref, x_ref, o_ref, *, lane_chunk, inv_vol, activation):
    # q_ref: (Fc, Co)     constant 0/1 pooling matrix, VMEM-resident across the grid
    # x_ref: (tb, k, Fc)  tb slabs x k depth planes x Fc flattened spatial lanes
    # o_ref: (tb, Fo)     pooled rows; this j-step produces columns [j*Co, (j+1)*Co)
    tb, k, fc = x_ref.shape
    co = q_ref.shape[1]
    acc = jnp.zeros((tb, co), jnp.float32)
    # Short static loop (<= ~10 iters): depth-window sum (intra-vreg sublane reduce) then
    # HxW pooling (MXU matmul).  Chunking the lane dim bounds the f32 intermediates so the
    # compute never outgrows the DMA shadow regardless of tile size / input dtype.
    for c0 in range(0, fc, lane_chunk):
        cs = min(lane_chunk, fc - c0)
        s = jnp.sum(x_ref[:, :, c0:c0 + cs].astype(jnp.float32), axis=1)      # (tb, cs)
        acc = acc + jnp.dot(s, q_ref[c0:c0 + cs, :],
                            precision=jax.lax.Precision.HIGHEST,
                            preferred_element_type=jnp.float32)
    y = acc * inv_vol
    if activation is not None:
        y = activation(y)
    y = y.astype(o_ref.dtype)
    if co == o_ref.shape[1]:          # common case: whole output row in one step
        o_ref[...] = y
    else:                             # large-plane path: write this H-window's columns
        j = pl.program_id(1)
        o_ref[:, pl.ds(j * co, co)] = y


def spatial_average(x, kernel_size: int = 8, activation=None, *, tile_bytes=None):
    """Equivalent of SpatialAverage.forward for a 5-D NCDHW tensor."""
    n, c, d, h, w = x.shape
    k = kernel_size
    do, ho, wo = d // k, h // k, w // k         # AvgPool3d defaults: stride=k, no pad, floor
    if min(do, ho, wo) == 0:
        raise ValueError("spatial dims must be >= kernel_size")
    Hc, Wc = ho * k, wo * k
    if (d, h, w) != (do * k, Hc, Wc):           # crop to the floor multiple (no copy if aligned)
        x = x[:, :, :do * k, :Hc, :Wc]

    G, F, Fo = n * c * do, Hc * Wc, ho * wo
    itemsize = x.dtype.itemsize
    if tile_bytes is None:
        tile_bytes = _default_tile_bytes()

    # --- H-window chunking: size of the VMEM-resident pooling matrix --------------------
    q_full_vmem = F * _round_up(Fo, 128) * 4    # lane-padded footprint of the full matrix
    if q_full_vmem <= 2 * 1024 * 1024 or ho == 1 or wo % 2 != 0:
        tho = ho                                # common case: whole plane handled per step
    else:
        tho = 1                                 # huge planes: one H-window row-group per step
    Fc, Co = tho * k * Wc, tho * wo             # lanes read / pooled columns written per step
    num_j = ho // tho

    # --- tile sizing from the *padded* VMEM footprint ------------------------------------
    slab_bytes = k * _round_up(Fc, 128) * itemsize        # one slab's block (sublanes exact)
    tb = max(1, min(G, tile_bytes // slab_bytes))
    if G >= 2:
        tb = min(tb, pl.cdiv(G, 2))             # >= 2 grid steps: overlap + both v7x TCs
    if tb != G and tb % 8 != 0:                 # output block's sublane dim must be 8-aligned
        tb = (tb // 8) * 8
        if tb == 0:
            tb = min(8, G)

    # Lane chunk for the in-kernel reduction: keeps the per-chunk f32 temp around ~2 MiB.
    lane_chunk = min(Fc, max(128, ((2 * 1024 * 1024) // (tb * k * 4)) // 128 * 128))

    q = jnp.asarray(_pooling_matrix(tho, wo, k))

    # Explicit VMEM budget: double-buffered input + resident pooling matrix + out + temps.
    q_vmem = Fc * _round_up(Co, 128) * 4
    out_vmem = _round_up(tb, 8) * _round_up(Fo, 128) * itemsize
    tmp_vmem = tb * k * lane_chunk * 4 + tb * lane_chunk * 4 + tb * _round_up(Co, 128) * 4
    vmem_need = 2 * tb * slab_bytes + 2 * q_vmem + 2 * out_vmem + tmp_vmem
    vmem_limit = int(min(vmem_need + max(vmem_need // 4, 4 * 1024 * 1024), 100 * 1024 * 1024))

    cost = pl.CostEstimate(
        flops=int(G * k * F + 2 * G * F * Co),            # depth adds + pooling matmul
        transcendentals=0,
        bytes_accessed=int(G * k * F * itemsize + G * Fo * itemsize + q.size * 4))

    kernel = functools.partial(_avgpool3d_kernel, lane_chunk=lane_chunk,
                               inv_vol=1.0 / float(k ** 3), activation=activation)

    out = pl.pallas_call(
        kernel,
        out_shape=jax.ShapeDtypeStruct((G, Fo), x.dtype),
        grid_spec=pltpu.PrefetchScalarGridSpec(
            num_scalar_prefetch=0,
            grid=(pl.cdiv(G, tb), num_j),
            in_specs=[
                pl.BlockSpec((Fc, Co), lambda i, j: (0, 0)),         # pooling matrix, resident
                pl.BlockSpec((tb, k, Fc), lambda i, j: (i, 0, j)),   # lane-dense input slabs
            ],
            out_specs=pl.BlockSpec((tb, Fo), lambda i, j: (i, 0)),   # resident across j
        ),
        compiler_params=pltpu.CompilerParams(
            dimension_semantics=("parallel", "arbitrary"),
            vmem_limit_bytes=vmem_limit),
        cost_estimate=cost,
    )(q, x.reshape(G, k, F))

    return out.reshape(n, c, do, ho, wo)


if __name__ == "__main__":
    key = jax.random.PRNGKey(0)
    # Small NCDHW shape consistent with AvgPool3d(kernel_size=8): N=2, C=4, D=H=W=16.
    x = jax.random.normal(key, (2, 4, 16, 16, 16), dtype=jnp.float32)

    # Default path (activation=None, matching the module default).
    y = jax.block_until_ready(spatial_average(x))
    ref = x.reshape(2, 4, 2, 8, 2, 8, 2, 8).mean(axis=(3, 5, 7))
    assert y.shape == (2, 4, 2, 2, 2)
    np.testing.assert_allclose(np.asarray(y), np.asarray(ref), rtol=1e-5, atol=1e-5)

    # Optional-activation path.
    y_act = jax.block_until_ready(spatial_average(x, activation=jax.nn.relu))
    np.testing.assert_allclose(np.asarray(y_act), np.maximum(np.asarray(ref), 0.0),
                               rtol=1e-5, atol=1e-5)

    print("KERNEL_OK")
</pallas_src>

<mosaic_0001>
module attributes {stable_mosaic.version = 11 : i64} {
  func.func @_avgpool3d_kernel(%arg0: i32, %arg1: i32, %arg2: memref<256x4xf32, #tpu.memory_space<vmem>>, %arg3: memref<8x8x256xf32, #tpu.memory_space<vmem>>, %arg4: memref<8x4xf32, #tpu.memory_space<vmem>>) attributes {dimension_semantics = [#tpu.dimension_semantics<parallel>, #tpu.dimension_semantics<arbitrary>], iteration_bounds = array<i64: 2, 1>, scalar_prefetch = 0 : i64, scratch_operands = 0 : i64, tpu.core_type = #tpu.core_type<tc>, window_params = [{pipeline_mode = #tpu.pipeline_mode<synchronous>, transform_indices = @transform_0, window_bounds = array<i64: 256, 4>}, {transform_indices = @transform_1, window_bounds = array<i64: 8, 8, 256>}, {transform_indices = @transform_2, window_bounds = array<i64: 8, 4>}]} {
    %cst = arith.constant 0.000000e+00 : f32
    %0 = vector.broadcast %cst : f32 to vector<8x4xf32>
    %c0 = arith.constant 0 : index
    %c0_0 = arith.constant 0 : index
    %c0_1 = arith.constant 0 : index
    %1 = vector.load %arg3[%c0, %c0_0, %c0_1] : memref<8x8x256xf32, #tpu.memory_space<vmem>>, vector<8x8x256xf32>
    %cst_2 = arith.constant dense<0.000000e+00> : vector<8x256xf32>
    %2 = vector.multi_reduction <add>, %1, %cst_2 [1] : vector<8x8x256xf32> to vector<8x256xf32>
    %c0_3 = arith.constant 0 : index
    %c0_4 = arith.constant 0 : index
    %3 = vector.load %arg2[%c0_3, %c0_4] : memref<256x4xf32, #tpu.memory_space<vmem>>, vector<256x4xf32>
    %cst_5 = arith.constant dense<0.000000e+00> : vector<8x4xf32>
    %4 = tpu.matmul %2, %3, %cst_5 {dimension_numbers = #tpu.dot_dimension_numbers<[1], [0], [0], [1], [0, 0, 1, 1], [], []>, precision = #tpu.contract_precision<fp32>} : vector<8x256xf32>, vector<256x4xf32>, vector<8x4xf32> -> vector<8x4xf32>
    %5 = arith.addf %0, %4 : vector<8x4xf32>
    %cst_6 = arith.constant 0.001953125 : f32
    %6 = vector.broadcast %cst_6 : f32 to vector<8x4xf32>
    %7 = arith.mulf %5, %6 : vector<8x4xf32>
    %c0_7 = arith.constant 0 : index
    %c0_8 = arith.constant 0 : index
    %8 = vector.load %arg4[%c0_7, %c0_8] : memref<8x4xf32, #tpu.memory_space<vmem>>, vector<8x4xf32>
    tpu.vector_store %arg4[%c0_7, %c0_8], %7 {strides = array<i32>} : memref<8x4xf32, #tpu.memory_space<vmem>>, vector<8x4xf32>,
    return
  }
  func.func @transform_0(%arg0: i32, %arg1: i32) -> (i32, i32) {
    %c0_i32 = arith.constant 0 : i32
    %c0_i32_0 = arith.constant 0 : i32
    %c0_i32_1 = arith.constant 0 : i32
    return %c0_i32, %c0_i32_0 : i32, i32
  }
  func.func @transform_1(%arg0: i32, %arg1: i32) -> (i32, i32, i32) {
    %c0_i32 = arith.constant 0 : i32
    %c0_i32_0 = arith.constant 0 : i32
    return %arg0, %c0_i32, %arg1 : i32, i32, i32
  }
  func.func @transform_2(%arg0: i32, %arg1: i32) -> (i32, i32) {
    %c0_i32 = arith.constant 0 : i32
    %c0_i32_0 = arith.constant 0 : i32
    return %arg0, %c0_i32 : i32, i32
  }
}

</mosaic_0001>

<llo_original>
// kernel: tpu_custom_call.1
$region0: #{tpu_custom_call.1}
  #allocation0 [shape = 'u32[]', space=smem, size = 0x4, offset = 0x4, fixed_abs, tag = 'smem constant byte address 0x4 - core index']
  #allocation1 [shape = 'u32[72,128]{1,0:T(1,128)}', space=vmem, size = 0x9000, scoped, tag = 'internal scratch']
  %s0 = inlined_call_operand.vmem [shape: f32[256,4], index: 0, kind: input, shape index: {}]
  %s1 = inlined_call_operand.vmem [shape: f32[16,8,256], index: 1, kind: input, shape index: {}]
  %s2 = inlined_call_operand.vmem [shape: f32[16,4], index: 2, kind: output, shape index: {}]
  %s3 = sld [smem:[#allocation0]]
  $region41: #{tpu_custom_call.1} parent=0
    _
  %s5 = ssub.s32 1, %s3
  %s6 = scalar_select 0, %s5, %s3
  loop: start=0, step=1, limit=4
  $region2: #{tpu_custom_call.1} parent=0 // loop_pre_header
    _
  $region3: #{tpu_custom_call.1} parent=0 // loop_header
    %s8 = sphi 0, %s12
    %p9 = scmp.ge.s32.totalorder %s8, 4
    %s15 = sphi 0, %s27
    %s16 = sphi 0, %s23
    %s17 = sphi 0, %s15
    %s18 = sphi 0, %s16
    %s19 = sphi 0, %s17
    %s20 = sphi 0, %s18
    %s28 = sphi 0, %s28
    %s30 = sphi 0, %s28
    %s31 = sphi 0, %s30
    %s45 = sphi 0, %s31
    %s53 = sphi 0, %s55
    %s56 = sphi 0, %s53
    %s57 = sphi 0, %s56
    %s73 = sphi 0, %s57
    %s79 = sphi 0, %s81
    %s82 = sphi 0, %s79
    %s83 = sphi 0, %s82
    %s99 = sphi 0, %s83
  $region4: #{tpu_custom_call.1} parent=0 // loop_header_branch
    %11 = sbr.rel (%p9) target = $region8
  $region5: #{tpu_custom_call.1} parent=0 // loop_body
    %s13 = ssub.s32 %s8, 1
    %s14 = ssub.s32 %s8, 2
    %s21 = sadd.s32 1, %s16
    %p22 = scmp.ge.s32.totalorder %s21, 1
    %s23 = scalar_select %p22, 0, %s21
    %s24 = sadd.s32 1, %s15
    %s25 = scalar_select %p22, %s24, %s15
    %p26 = scmp.ge.s32.totalorder %s25, 2
    %s27 = scalar_select %p26, 0, %s25
    %s29 = sadd.s32 %s28, 1
    %p32 = scmp.eq.s32.totalorder %s8, 1
    %p33 = scmp.ne.s32.totalorder %s28, %s30
    %p34 = scmp.eq.s32.totalorder %s8, 0
    %p35 = por %p33, %p34
    %p36 = scmp.ne.s32.totalorder %s28, %s30
    %p37 = scmp.eq.s32.totalorder %s13, 1
    %p38 = por %p36, %p37
    %p39 = scmp.ne.s32.totalorder %s30, %s31
    %p40 = scmp.eq.s32.totalorder %s13, 0
    %p41 = por %p39, %p40
    %p42 = scmp.ne.s32.totalorder %s30, %s31
    %p43 = scmp.eq.s32.totalorder %s14, 1
    %p44 = por %p42, %p43
    %p46 = scmp.ne.s32.totalorder %s31, %s45
    %p47 = scmp.eq.s32.totalorder %s14, 0
    %p48 = por %p46, %p47
    %s49 = ssub.s32 %s15, %s27
    %s50 = ssub.s32 %s16, %s23
    %s51 = sor.u32 %s49, %s50
    %p52 = scmp.eq.s32.totalorder %s51, 0
    %s54 = sadd.s32 %s53, 1
    %s55 = scalar_select %p52, %s53, %s54
    %p58 = pneg %p52
    %p59 = scmp.eq.s32.totalorder %s8, 1
    %p60 = por %p58, %p59
    %p61 = scmp.ne.s32.totalorder %s53, %s56
    %p62 = scmp.eq.s32.totalorder %s8, 0
    %p63 = por %p61, %p62
    %p64 = scmp.ne.s32.totalorder %s53, %s56
    %p65 = scmp.eq.s32.totalorder %s13, 1
    %p66 = por %p64, %p65
    %p67 = scmp.ne.s32.totalorder %s56, %s57
    %p68 = scmp.eq.s32.totalorder %s13, 0
    %p69 = por %p67, %p68
    %p70 = scmp.ne.s32.totalorder %s56, %s57
    %p71 = scmp.eq.s32.totalorder %s14, 1
    %p72 = por %p70, %p71
    %p74 = scmp.ne.s32.totalorder %s57, %s73
    %p75 = scmp.eq.s32.totalorder %s14, 0
    %p76 = por %p74, %p75
    %s77 = ssub.s32 %s15, %s27
    %p78 = scmp.eq.s32.totalorder %s77, 0
    %s80 = sadd.s32 %s79, 1
    %s81 = scalar_select %p78, %s79, %s80
    %p84 = pneg %p78
    %p85 = scmp.eq.s32.totalorder %s8, 1
    %p86 = por %p84, %p85
    %p87 = scmp.ne.s32.totalorder %s79, %s82
    %p88 = scmp.eq.s32.totalorder %s8, 0
    %p89 = por %p87, %p88
    %p90 = scmp.ne.s32.totalorder %s79, %s82
    %p91 = scmp.eq.s32.totalorder %s13, 1
    %p92 = por %p90, %p91
    %p93 = scmp.ne.s32.totalorder %s82, %s83
    %p94 = scmp.eq.s32.totalorder %s13, 0
    %p95 = por %p93, %p94
    %p96 = scmp.ne.s32.totalorder %s82, %s83
    %p97 = scmp.eq.s32.totalorder %s14, 1
    %p98 = por %p96, %p97
    %p100 = scmp.ne.s32.totalorder %s83, %s99
    %p101 = scmp.eq.s32.totalorder %s14, 0
    %p102 = por %p100, %p101
    %p103 = scmp.le.s32.totalorder 1, %s8
    %p104 = scmp.lt.s32.totalorder %s8, 3
    %p105 = pnand %p103, %p104
    %p106 = pneg %p105
    // Predicated region
    $region9: #{tpu_custom_call.1} parent=5 // pred_check
      _
    $region10: #{tpu_custom_call.1} parent=5 // pred_check_branch
      %108 = sbr.rel (%p105) target = $region12
    $region11: #{tpu_custom_call.1} parent=5 // pred_region
      %s109 = ssub.s32 %s8, 1
      // Predicated region
      $region13: #{tpu_custom_call.1} parent=11 // pred_check
        %p110 = pneg %p41
      $region14: #{tpu_custom_call.1} parent=11 // pred_check_branch
        %112 = sbr.rel (%p110) target = $region16
      $region15: #{tpu_custom_call.1} parent=11 // pred_region
        _
      $region16: #{tpu_custom_call.1} parent=11 // pred_fallthru
        _
    $region12: #{tpu_custom_call.1} parent=5 // pred_fallthru
      _
    %p113 = scmp.lt.s32.totalorder %s8, 2
    // Predicated region
    $region17: #{tpu_custom_call.1} parent=5 // pred_check
      %p114 = pneg %p113
    $region18: #{tpu_custom_call.1} parent=5 // pred_check_branch
      %116 = sbr.rel (%p114) target = $region20
    $region19: #{tpu_custom_call.1} parent=5 // pred_region
      // Predicated region
      $region21: #{tpu_custom_call.1} parent=19 // pred_check
        %p117 = pneg %p63
      $region22: #{tpu_custom_call.1} parent=19 // pred_check_branch
        %119 = sbr.rel (%p117) target = $region24
      $region23: #{tpu_custom_call.1} parent=19 // pred_region
        %s120 = smul.u32 8, %s15
        %s121 = smul.u32 2, %s16
        %p122 = scmp.lt.s32.totalorder %s120, 15
        %s123 = scalar_select %p122, %s120, 15
        %p124 = scmp.lt.s32.totalorder %s121, 1
        %s125 = scalar_select %p124, %s121, 1
        %s126 = smul.addr %s123, 2
        %s127 = sadd.s32 %s125, %s126
        %s128 = smul.addr %s127, 8
        %s129 = scalar_lea.vmem %s1, %s128
        %s130 = smul.u32 8, %s15
        %s131 = smul.u32 2, %s16
      $region24: #{tpu_custom_call.1} parent=19 // pred_fallthru
        _
    $region20: #{tpu_custom_call.1} parent=5 // pred_fallthru
      _
    %p132 = scmp.le.s32.totalorder 1, %s8
    %p133 = scmp.lt.s32.totalorder %s8, 3
    %p134 = pnand %p132, %p133
    %p135 = pneg %p134
    // Predicated region
    $region25: #{tpu_custom_call.1} parent=5 // pred_check
      _
    $region26: #{tpu_custom_call.1} parent=5 // pred_check_branch
      %137 = sbr.rel (%p134) target = $region28
    $region27: #{tpu_custom_call.1} parent=5 // pred_region
      %s138 = ssub.s32 %s8, 1
      %p139 = pneg %p41
      %p140 = pneg %p38
      %s141 = smul.u32 8, %s17
      %s142 = smul.u32 2, %s18
      %p143 = scmp.lt.s32.totalorder %s141, 15
      %s144 = scalar_select %p143, %s141, 15
      %p145 = scmp.lt.s32.totalorder %s142, 1
      %s146 = scalar_select %p145, %s142, 1
      %s147 = smul.addr %s144, 2
      %s148 = sadd.s32 %s146, %s147
      %s149 = smul.addr %s148, 8
      %s150 = scalar_lea.vmem %s1, %s149
      %p151 = pneg %p69
      %p152 = pneg %p66
      %p153 = pneg %p95
      %p154 = pneg %p92
      %p155 = scmp.lt.s32.totalorder %s17, 1
      %s156 = scalar_select %p155, %s17, 1
      %s157 = smul.addr %s156, 8
      %s158 = scalar_lea.vmem %s2, %s157
      %s159 = smul.u32 8, %s17
      %s160 = smul.u32 2, %s18
      %p161 = scmp.lt.s32.totalorder %s159, 15
      %s162 = scalar_select %p161, %s159, 15
      %p163 = scmp.lt.s32.totalorder %s160, 1
      %s164 = scalar_select %p163, %s160, 1
      %s165 = smul.addr %s162, 2
      %s166 = sadd.s32 %s164, %s165
      %s167 = smul.addr %s166, 8
      %s168 = scalar_lea.vmem %s1, %s167
      %s169 = smul.u32 8, %s17
      %s170 = smul.u32 2, %s18
      %p171 = scmp.lt.s32.totalorder %s17, 1
      %s172 = scalar_select %p171, %s17, 1
      %s173 = smul.addr %s172, 8
      %s174 = scalar_lea.vmem %s2, %s173
      %v175 = vld [vmem:[%s168] sm:$0xff]
      %v176 = vld [vmem:[%s168 + $0x8] sm:$0xff]
      %v177 = vld [vmem:[%s168 + $0x10] sm:$0xff]
      %v178 = vld [vmem:[%s168 + $0x18] sm:$0xff]
      %v179 = vld [vmem:[%s168 + $0x20] sm:$0xff]
      %v180 = vld [vmem:[%s168 + $0x28] sm:$0xff]
      %v181 = vld [vmem:[%s168 + $0x30] sm:$0xff]
      %v182 = vld [vmem:[%s168 + $0x38] sm:$0xff]
      %v183 = vld [vmem:[%s168 + $0x40] sm:$0xff]
      %v184 = vld [vmem:[%s168 + $0x48] sm:$0xff]
      %v185 = vld [vmem:[%s168 + $0x50] sm:$0xff]
      %v186 = vld [vmem:[%s168 + $0x58] sm:$0xff]
      %v187 = vld [vmem:[%s168 + $0x60] sm:$0xff]
      %v188 = vld [vmem:[%s168 + $0x68] sm:$0xff]
      %v189 = vld [vmem:[%s168 + $0x70] sm:$0xff]
      %v190 = vld [vmem:[%s168 + $0x78] sm:$0xff]
      %v191 = vrot.slane %v175, 4
      %v192 = vadd.f32 %v175, %v191
      %v193 = vrot.slane %v192, 2
      %v194 = vadd.f32 %v192, %v193
      %v195 = vrot.slane %v194, 1
      %v196 = vadd.f32 %v194, %v195
      %v197 = vrot.slane %v176, 4
      %v198 = vadd.f32 %v176, %v197
      %v199 = vrot.slane %v198, 2
      %v200 = vadd.f32 %v198, %v199
      %v201 = vrot.slane %v200, 1
      %v202 = vadd.f32 %v200, %v201
      %v203 = vrot.slane %v177, 4
      %v204 = vadd.f32 %v177, %v203
      %v205 = vrot.slane %v204, 2
      %v206 = vadd.f32 %v204, %v205
      %v207 = vrot.slane %v206, 1
      %v208 = vadd.f32 %v206, %v207
      %v209 = vrot.slane %v178, 4
      %v210 = vadd.f32 %v178, %v209
      %v211 = vrot.slane %v210, 2
      %v212 = vadd.f32 %v210, %v211
      %v213 = vrot.slane %v212, 1
      %v214 = vadd.f32 %v212, %v213
      %v215 = vrot.slane %v179, 4
      %v216 = vadd.f32 %v179, %v215
      %v217 = vrot.slane %v216, 2
      %v218 = vadd.f32 %v216, %v217
      %v219 = vrot.slane %v218, 1
      %v220 = vadd.f32 %v218, %v219
      %v221 = vrot.slane %v180, 4
      %v222 = vadd.f32 %v180, %v221
      %v223 = vrot.slane %v222, 2
      %v224 = vadd.f32 %v222, %v223
      %v225 = vrot.slane %v224, 1
      %v226 = vadd.f32 %v224, %v225
      %v227 = vrot.slane %v181, 4
      %v228 = vadd.f32 %v181, %v227
      %v229 = vrot.slane %v228, 2
      %v230 = vadd.f32 %v228, %v229
      %v231 = vrot.slane %v230, 1
      %v232 = vadd.f32 %v230, %v231
      %v233 = vrot.slane %v182, 4
      %v234 = vadd.f32 %v182, %v233
      %v235 = vrot.slane %v234, 2
      %v236 = vadd.f32 %v234, %v235
      %v237 = vrot.slane %v236, 1
      %v238 = vadd.f32 %v236, %v237
      %v239 = vrot.slane %v183, 4
      %v240 = vadd.f32 %v183, %v239
      %v241 = vrot.slane %v240, 2
      %v242 = vadd.f32 %v240, %v241
      %v243 = vrot.slane %v242, 1
      %v244 = vadd.f32 %v242, %v243
      %v245 = vrot.slane %v184, 4
      %v246 = vadd.f32 %v184, %v245
      %v247 = vrot.slane %v246, 2
      %v248 = vadd.f32 %v246, %v247
      %v249 = vrot.slane %v248, 1
      %v250 = vadd.f32 %v248, %v249
      %v251 = vrot.slane %v185, 4
      %v252 = vadd.f32 %v185, %v251
      %v253 = vrot.slane %v252, 2
      %v254 = vadd.f32 %v252, %v253
      %v255 = vrot.slane %v254, 1
      %v256 = vadd.f32 %v254, %v255
      %v257 = vrot.slane %v186, 4
      %v258 = vadd.f32 %v186, %v257
      %v259 = vrot.slane %v258, 2
      %v260 = vadd.f32 %v258, %v259
      %v261 = vrot.slane %v260, 1
      %v262 = vadd.f32 %v260, %v261
      %v263 = vrot.slane %v187, 4
      %v264 = vadd.f32 %v187, %v263
      %v265 = vrot.slane %v264, 2
      %v266 = vadd.f32 %v264, %v265
      %v267 = vrot.slane %v266, 1
      %v268 = vadd.f32 %v266, %v267
      %v269 = vrot.slane %v188, 4
      %v270 = vadd.f32 %v188, %v269
      %v271 = vrot.slane %v270, 2
      %v272 = vadd.f32 %v270, %v271
      %v273 = vrot.slane %v272, 1
      %v274 = vadd.f32 %v272, %v273
      %v275 = vrot.slane %v189, 4
      %v276 = vadd.f32 %v189, %v275
      %v277 = vrot.slane %v276, 2
      %v278 = vadd.f32 %v276, %v277
      %v279 = vrot.slane %v278, 1
      %v280 = vadd.f32 %v278, %v279
      %v281 = vrot.slane %v190, 4
      %v282 = vadd.f32 %v190, %v281
      %v283 = vrot.slane %v282, 2
      %v284 = vadd.f32 %v282, %v283
      %v285 = vrot.slane %v284, 1
      %v286 = vadd.f32 %v284, %v285
      %v287 = vld [vmem:[%s0] sm:$0xff]
      %v288 = vld [vmem:[%s0 + $0x8] sm:$0xff]
      %v289 = vld [vmem:[%s0 + $0x10] sm:$0xff]
      %v290 = vld [vmem:[%s0 + $0x18] sm:$0xff]
      %v291 = vld [vmem:[%s0 + $0x20] sm:$0xff]
      %v292 = vld [vmem:[%s0 + $0x28] sm:$0xff]
      %v293 = vld [vmem:[%s0 + $0x30] sm:$0xff]
      %v294 = vld [vmem:[%s0 + $0x38] sm:$0xff]
      %v295 = vld [vmem:[%s0 + $0x40] sm:$0xff]
      %v296 = vld [vmem:[%s0 + $0x48] sm:$0xff]
      %v297 = vld [vmem:[%s0 + $0x50] sm:$0xff]
      %v298 = vld [vmem:[%s0 + $0x58] sm:$0xff]
      %v299 = vld [vmem:[%s0 + $0x60] sm:$0xff]
      %v300 = vld [vmem:[%s0 + $0x68] sm:$0xff]
      %v301 = vld [vmem:[%s0 + $0x70] sm:$0xff]
      %v302 = vld [vmem:[%s0 + $0x78] sm:$0xff]
      %v303 = vld [vmem:[%s0 + $0x80] sm:$0xff]
      %v304 = vld [vmem:[%s0 + $0x88] sm:$0xff]
      %v305 = vld [vmem:[%s0 + $0x90] sm:$0xff]
      %v306 = vld [vmem:[%s0 + $0x98] sm:$0xff]
      %v307 = vld [vmem:[%s0 + $0xa0] sm:$0xff]
      %v308 = vld [vmem:[%s0 + $0xa8] sm:$0xff]
      %v309 = vld [vmem:[%s0 + $0xb0] sm:$0xff]
      %v310 = vld [vmem:[%s0 + $0xb8] sm:$0xff]
      %v311 = vld [vmem:[%s0 + $0xc0] sm:$0xff]
      %v312 = vld [vmem:[%s0 + $0xc8] sm:$0xff]
      %v313 = vld [vmem:[%s0 + $0xd0] sm:$0xff]
      %v314 = vld [vmem:[%s0 + $0xd8] sm:$0xff]
      %v315 = vld [vmem:[%s0 + $0xe0] sm:$0xff]
      %v316 = vld [vmem:[%s0 + $0xe8] sm:$0xff]
      %v317 = vld [vmem:[%s0 + $0xf0] sm:$0xff]
      %v318 = vld [vmem:[%s0 + $0xf8] sm:$0xff]
      %vm335 = vcmask 1041409
      %v336 = vsel %vm335, %v208, %v196
      %vm337 = vcmask 1042434
      %v338 = vsel %vm337, %v220, %v336
      %vm339 = vcmask 1043459
      %v340 = vsel %vm339, %v232, %v338
      %vm341 = vcmask 1044484
      %v342 = vsel %vm341, %v244, %v340
      %vm343 = vcmask 1045509
      %v344 = vsel %vm343, %v256, %v342
      %vm345 = vcmask 1046534
      %v346 = vsel %vm345, %v268, %v344
      %vm347 = vcmask 1047559
      %v348 = vsel %vm347, %v280, %v346
      %v349 = vsel %vm335, %v214, %v202
      %v350 = vsel %vm337, %v226, %v349
      %v351 = vsel %vm339, %v238, %v350
      %v352 = vsel %vm341, %v250, %v351
      %v353 = vsel %vm343, %v262, %v352
      %v354 = vsel %vm345, %v274, %v353
      %v355 = vsel %vm347, %v286, %v354
      %v358 = vand.u32 %v302, 4294901760
      %359 = vmatpush.msra.mxu0 %v358
      %v360 = vand.u32 %v301, 4294901760
      %361 = vmatpush.msra.mxu0 %v360
      %v362 = vand.u32 %v300, 4294901760
      %363 = vmatpush.msra.mxu0 %v362
      %v364 = vand.u32 %v299, 4294901760
      %365 = vmatpush.msra.mxu0 %v364
      %v366 = vand.u32 %v298, 4294901760
      %367 = vmatpush.msra.mxu0 %v366
      %v368 = vand.u32 %v297, 4294901760
      %369 = vmatpush.msra.mxu0 %v368
      %v370 = vand.u32 %v296, 4294901760
      %371 = vmatpush.msra.mxu0 %v370
      %v372 = vand.u32 %v295, 4294901760
      %373 = vmatpush.msra.mxu0 %v372
      %v374 = vand.u32 %v294, 4294901760
      %375 = vmatpush.msra.mxu0 %v374
      %v376 = vand.u32 %v293, 4294901760
      %377 = vmatpush.msra.mxu0 %v376
      %v378 = vand.u32 %v292, 4294901760
      %379 = vmatpush.msra.mxu0 %v378
      %v380 = vand.u32 %v291, 4294901760
      %381 = vmatpush.msra.mxu0 %v380
      %v382 = vand.u32 %v290, 4294901760
      %383 = vmatpush.msra.mxu0 %v382
      %v384 = vand.u32 %v289, 4294901760
      %385 = vmatpush.msra.mxu0 %v384
      %v386 = vand.u32 %v288, 4294901760
      %387 = vmatpush.msra.mxu0 %v386
      %v388 = vand.u32 %v287, 4294901760
      %389 = vmatpush.msra.mxu0 %v388
      %v390 = vand.u32 %v348, 4294901760
      %v391 = vsub.f32 %v348, %v390
      %v392 = vand.u32 %v391, 4294901760
      %v393 = vsub.f32 %v391, %v392
      %v394 = vand.u32 %v393, 4294901760
      %395 = vmatmul.f32.gmra.mxu0 %v394
      %v396 = vpop.f32.mrf.mxu0
      %v397 = vadd.f32 0.0, %v396
      %398 = vdwg.mxu0
      %v399 = vand.u32 %v302, 4294901760
      %v400 = vsub.f32 %v302, %v399
      %v401 = vand.u32 %v400, 4294901760
      %v402 = vsub.f32 %v400, %v401
      %v403 = vand.u32 %v402, 4294901760
      %404 = vmatpush.msra.mxu0 %v403
      %v405 = vand.u32 %v301, 4294901760
      %v406 = vsub.f32 %v301, %v405
      %v407 = vand.u32 %v406, 4294901760
      %v408 = vsub.f32 %v406, %v407
      %v409 = vand.u32 %v408, 4294901760
      %410 = vmatpush.msra.mxu0 %v409
      %v411 = vand.u32 %v300, 4294901760
      %v412 = vsub.f32 %v300, %v411
      %v413 = vand.u32 %v412, 4294901760
      %v414 = vsub.f32 %v412, %v413
      %v415 = vand.u32 %v414, 4294901760
      %416 = vmatpush.msra.mxu0 %v415
      %v417 = vand.u32 %v299, 4294901760
      %v418 = vsub.f32 %v299, %v417
      %v419 = vand.u32 %v418, 4294901760
      %v420 = vsub.f32 %v418, %v419
      %v421 = vand.u32 %v420, 4294901760
      %422 = vmatpush.msra.mxu0 %v421
      %v423 = vand.u32 %v298, 4294901760
      %v424 = vsub.f32 %v298, %v423
      %v425 = vand.u32 %v424, 4294901760
      %v426 = vsub.f32 %v424, %v425
      %v427 = vand.u32 %v426, 4294901760
      %428 = vmatpush.msra.mxu0 %v427
      %v429 = vand.u32 %v297, 4294901760
      %v430 = vsub.f32 %v297, %v429
      %v431 = vand.u32 %v430, 4294901760
      %v432 = vsub.f32 %v430, %v431
      %v433 = vand.u32 %v432, 4294901760
      %434 = vmatpush.msra.mxu0 %v433
      %v435 = vand.u32 %v296, 4294901760
      %v436 = vsub.f32 %v296, %v435
      %v437 = vand.u32 %v436, 4294901760
      %v438 = vsub.f32 %v436, %v437
      %v439 = vand.u32 %v438, 4294901760
      %440 = vmatpush.msra.mxu0 %v439
      %v441 = vand.u32 %v295, 4294901760
      %v442 = vsub.f32 %v295, %v441
      %v443 = vand.u32 %v442, 4294901760
      %v444 = vsub.f32 %v442, %v443
      %v445 = vand.u32 %v444, 4294901760
      %446 = vmatpush.msra.mxu0 %v445
      %v447 = vand.u32 %v294, 4294901760
      %v448 = vsub.f32 %v294, %v447
      %v449 = vand.u32 %v448, 4294901760
      %v450 = vsub.f32 %v448, %v449
      %v451 = vand.u32 %v450, 4294901760
      %452 = vmatpush.msra.mxu0 %v451
      %v453 = vand.u32 %v293, 4294901760
      %v454 = vsub.f32 %v293, %v453
      %v455 = vand.u32 %v454, 4294901760
      %v456 = vsub.f32 %v454, %v455
      %v457 = vand.u32 %v456, 4294901760
      %458 = vmatpush.msra.mxu0 %v457
      %v459 = vand.u32 %v292, 4294901760
      %v460 = vsub.f32 %v292, %v459
      %v461 = vand.u32 %v460, 4294901760
      %v462 = vsub.f32 %v460, %v461
      %v463 = vand.u32 %v462, 4294901760
      %464 = vmatpush.msra.mxu0 %v463
      %v465 = vand.u32 %v291, 4294901760
      %v466 = vsub.f32 %v291, %v465
      %v467 = vand.u32 %v466, 4294901760
      %v468 = vsub.f32 %v466, %v467
      %v469 = vand.u32 %v468, 4294901760
      %470 = vmatpush.msra.mxu0 %v469
      %v471 = vand.u32 %v290, 4294901760
      %v472 = vsub.f32 %v290, %v471
      %v473 = vand.u32 %v472, 4294901760
      %v474 = vsub.f32 %v472, %v473
      %v475 = vand.u32 %v474, 4294901760
      %476 = vmatpush.msra.mxu0 %v475
      %v477 = vand.u32 %v289, 4294901760
      %v478 = vsub.f32 %v289, %v477
      %v479 = vand.u32 %v478, 4294901760
      %v480 = vsub.f32 %v478, %v479
      %v481 = vand.u32 %v480, 4294901760
      %482 = vmatpush.msra.mxu0 %v481
      %v483 = vand.u32 %v288, 4294901760
      %v484 = vsub.f32 %v288, %v483
      %v485 = vand.u32 %v484, 4294901760
      %v486 = vsub.f32 %v484, %v485
      %v487 = vand.u32 %v486, 4294901760
      %488 = vmatpush.msra.mxu0 %v487
      %v489 = vand.u32 %v287, 4294901760
      %v490 = vsub.f32 %v287, %v489
      %v491 = vand.u32 %v490, 4294901760
      %v492 = vsub.f32 %v490, %v491
      %v493 = vand.u32 %v492, 4294901760
      %494 = vmatpush.msra.mxu0 %v493
      %v495 = vand.u32 %v348, 4294901760
      %496 = vmatmul.f32.gmra.mxu0 %v495
      %v497 = vpop.f32.mrf.mxu0
      %v498 = vadd.f32 %v397, %v497
      %499 = vdwg.mxu0
      %v500 = vand.u32 %v302, 4294901760
      %v501 = vsub.f32 %v302, %v500
      %502 = vmatpush.msra.mxu0 %v501
      %v503 = vand.u32 %v301, 4294901760
      %v504 = vsub.f32 %v301, %v503
      %505 = vmatpush.msra.mxu0 %v504
      %v506 = vand.u32 %v300, 4294901760
      %v507 = vsub.f32 %v300, %v506
      %508 = vmatpush.msra.mxu0 %v507
      %v509 = vand.u32 %v299, 4294901760
      %v510 = vsub.f32 %v299, %v509
      %511 = vmatpush.msra.mxu0 %v510
      %v512 = vand.u32 %v298, 4294901760
      %v513 = vsub.f32 %v298, %v512
      %514 = vmatpush.msra.mxu0 %v513
      %v515 = vand.u32 %v297, 4294901760
      %v516 = vsub.f32 %v297, %v515
      %517 = vmatpush.msra.mxu0 %v516
      %v518 = vand.u32 %v296, 4294901760
      %v519 = vsub.f32 %v296, %v518
      %520 = vmatpush.msra.mxu0 %v519
      %v521 = vand.u32 %v295, 4294901760
      %v522 = vsub.f32 %v295, %v521
      %523 = vmatpush.msra.mxu0 %v522
      %v524 = vand.u32 %v294, 4294901760
      %v525 = vsub.f32 %v294, %v524
      %526 = vmatpush.msra.mxu0 %v525
      %v527 = vand.u32 %v293, 4294901760
      %v528 = vsub.f32 %v293, %v527
      %529 = vmatpush.msra.mxu0 %v528
      %v530 = vand.u32 %v292, 4294901760
      %v531 = vsub.f32 %v292, %v530
      %532 = vmatpush.msra.mxu0 %v531
      %v533 = vand.u32 %v291, 4294901760
      %v534 = vsub.f32 %v291, %v533
      %535 = vmatpush.msra.mxu0 %v534
      %v536 = vand.u32 %v290, 4294901760
      %v537 = vsub.f32 %v290, %v536
      %538 = vmatpush.msra.mxu0 %v537
      %v539 = vand.u32 %v289, 4294901760
      %v540 = vsub.f32 %v289, %v539
      %541 = vmatpush.msra.mxu0 %v540
      %v542 = vand.u32 %v288, 4294901760
      %v543 = vsub.f32 %v288, %v542
      %544 = vmatpush.msra.mxu0 %v543
      %v545 = vand.u32 %v287, 4294901760
      %v546 = vsub.f32 %v287, %v545
      %547 = vmatpush.msra.mxu0 %v546
      %v548 = vand.u32 %v348, 4294901760
      %v549 = vsub.f32 %v348, %v548
      %550 = vmatmul.f32.gmra.mxu0 %v549
      %v551 = vpop.f32.mrf.mxu0
      %v552 = vadd.f32 %v498, %v551
      %553 = vdwg.mxu0
      %v554 = vand.u32 %v302, 4294901760
      %555 = vmatpush.msra.mxu0 %v554
      %v556 = vand.u32 %v301, 4294901760
      %557 = vmatpush.msra.mxu0 %v556
      %v558 = vand.u32 %v300, 4294901760
      %559 = vmatpush.msra.mxu0 %v558
      %v560 = vand.u32 %v299, 4294901760
      %561 = vmatpush.msra.mxu0 %v560
      %v562 = vand.u32 %v298, 4294901760
      %563 = vmatpush.msra.mxu0 %v562
      %v564 = vand.u32 %v297, 4294901760
      %565 = vmatpush.msra.mxu0 %v564
      %v566 = vand.u32 %v296, 4294901760
      %567 = vmatpush.msra.mxu0 %v566
      %v568 = vand.u32 %v295, 4294901760
      %569 = vmatpush.msra.mxu0 %v568
      %v570 = vand.u32 %v294, 4294901760
      %571 = vmatpush.msra.mxu0 %v570
      %v572 = vand.u32 %v293, 4294901760
      %573 = vmatpush.msra.mxu0 %v572
      %v574 = vand.u32 %v292, 4294901760
      %575 = vmatpush.msra.mxu0 %v574
      %v576 = vand.u32 %v291, 4294901760
      %577 = vmatpush.msra.mxu0 %v576
      %v578 = vand.u32 %v290, 4294901760
      %579 = vmatpush.msra.mxu0 %v578
      %v580 = vand.u32 %v289, 4294901760
      %581 = vmatpush.msra.mxu0 %v580
      %v582 = vand.u32 %v288, 4294901760
      %583 = vmatpush.msra.mxu0 %v582
      %v584 = vand.u32 %v287, 4294901760
      %585 = vmatpush.msra.mxu0 %v584
      %v586 = vand.u32 %v348, 4294901760
      %v587 = vsub.f32 %v348, %v586
      %v588 = vand.u32 %v587, 4294901760
      %589 = vmatmul.f32.gmra.mxu0 %v588
      %v590 = vpop.f32.mrf.mxu0
      %v591 = vadd.f32 %v552, %v590
      %592 = vdwg.mxu0
      %v593 = vand.u32 %v302, 4294901760
      %v594 = vsub.f32 %v302, %v593
      %v595 = vand.u32 %v594, 4294901760
      %596 = vmatpush.msra.mxu0 %v595
      %v597 = vand.u32 %v301, 4294901760
      %v598 = vsub.f32 %v301, %v597
      %v599 = vand.u32 %v598, 4294901760
      %600 = vmatpush.msra.mxu0 %v599
      %v601 = vand.u32 %v300, 4294901760
      %v602 = vsub.f32 %v300, %v601
      %v603 = vand.u32 %v602, 4294901760
      %604 = vmatpush.msra.mxu0 %v603
      %v605 = vand.u32 %v299, 4294901760
      %v606 = vsub.f32 %v299, %v605
      %v607 = vand.u32 %v606, 4294901760
      %608 = vmatpush.msra.mxu0 %v607
      %v609 = vand.u32 %v298, 4294901760
      %v610 = vsub.f32 %v298, %v609
      %v611 = vand.u32 %v610, 4294901760
      %612 = vmatpush.msra.mxu0 %v611
      %v613 = vand.u32 %v297, 4294901760
      %v614 = vsub.f32 %v297, %v613
      %v615 = vand.u32 %v614, 4294901760
      %616 = vmatpush.msra.mxu0 %v615
      %v617 = vand.u32 %v296, 4294901760
      %v618 = vsub.f32 %v296, %v617
      %v619 = vand.u32 %v618, 4294901760
      %620 = vmatpush.msra.mxu0 %v619
      %v621 = vand.u32 %v295, 4294901760
      %v622 = vsub.f32 %v295, %v621
      %v623 = vand.u32 %v622, 4294901760
      %624 = vmatpush.msra.mxu0 %v623
      %v625 = vand.u32 %v294, 4294901760
      %v626 = vsub.f32 %v294, %v625
      %v627 = vand.u32 %v626, 4294901760
      %628 = vmatpush.msra.mxu0 %v627
      %v629 = vand.u32 %v293, 4294901760
      %v630 = vsub.f32 %v293, %v629
      %v631 = vand.u32 %v630, 4294901760
      %632 = vmatpush.msra.mxu0 %v631
      %v633 = vand.u32 %v292, 4294901760
      %v634 = vsub.f32 %v292, %v633
      %v635 = vand.u32 %v634, 4294901760
      %636 = vmatpush.msra.mxu0 %v635
      %v637 = vand.u32 %v291, 4294901760
      %v638 = vsub.f32 %v291, %v637
      %v639 = vand.u32 %v638, 4294901760
      %640 = vmatpush.msra.mxu0 %v639
      %v641 = vand.u32 %v290, 4294901760
      %v642 = vsub.f32 %v290, %v641
      %v643 = vand.u32 %v642, 4294901760
      %644 = vmatpush.msra.mxu0 %v643
      %v645 = vand.u32 %v289, 4294901760
      %v646 = vsub.f32 %v289, %v645
      %v647 = vand.u32 %v646, 4294901760
      %648 = vmatpush.msra.mxu0 %v647
      %v649 = vand.u32 %v288, 4294901760
      %v650 = vsub.f32 %v288, %v649
      %v651 = vand.u32 %v650, 4294901760
      %652 = vmatpush.msra.mxu0 %v651
      %v653 = vand.u32 %v287, 4294901760
      %v654 = vsub.f32 %v287, %v653
      %v655 = vand.u32 %v654, 4294901760
      %656 = vmatpush.msra.mxu0 %v655
      %v657 = vand.u32 %v348, 4294901760
      %658 = vmatmul.f32.gmra.mxu0 %v657
      %v659 = vpop.f32.mrf.mxu0
      %v660 = vadd.f32 %v591, %v659
      %661 = vdwg.mxu0
      %v662 = vand.u32 %v302, 4294901760
      %663 = vmatpush.msra.mxu0 %v662
      %v664 = vand.u32 %v301, 4294901760
      %665 = vmatpush.msra.mxu0 %v664
      %v666 = vand.u32 %v300, 4294901760
      %667 = vmatpush.msra.mxu0 %v666
      %v668 = vand.u32 %v299, 4294901760
      %669 = vmatpush.msra.mxu0 %v668
      %v670 = vand.u32 %v298, 4294901760
      %671 = vmatpush.msra.mxu0 %v670
      %v672 = vand.u32 %v297, 4294901760
      %673 = vmatpush.msra.mxu0 %v672
      %v674 = vand.u32 %v296, 4294901760
      %675 = vmatpush.msra.mxu0 %v674
      %v676 = vand.u32 %v295, 4294901760
      %677 = vmatpush.msra.mxu0 %v676
      %v678 = vand.u32 %v294, 4294901760
      %679 = vmatpush.msra.mxu0 %v678
      %v680 = vand.u32 %v293, 4294901760
      %681 = vmatpush.msra.mxu0 %v680
      %v682 = vand.u32 %v292, 4294901760
      %683 = vmatpush.msra.mxu0 %v682
      %v684 = vand.u32 %v291, 4294901760
      %685 = vmatpush.msra.mxu0 %v684
      %v686 = vand.u32 %v290, 4294901760
      %687 = vmatpush.msra.mxu0 %v686
      %v688 = vand.u32 %v289, 4294901760
      %689 = vmatpush.msra.mxu0 %v688
      %v690 = vand.u32 %v288, 4294901760
      %691 = vmatpush.msra.mxu0 %v690
      %v692 = vand.u32 %v287, 4294901760
      %693 = vmatpush.msra.mxu0 %v692
      %v694 = vand.u32 %v348, 4294901760
      %695 = vmatmul.f32.gmra.mxu0 %v694
      %v696 = vpop.f32.mrf.mxu0
      %v697 = vadd.f32 %v660, %v696
      %698 = vdwg.mxu0
      %v699 = vand.u32 %v318, 4294901760
      %700 = vmatpush.msra.mxu0 %v699
      %v701 = vand.u32 %v317, 4294901760
      %702 = vmatpush.msra.mxu0 %v701
      %v703 = vand.u32 %v316, 4294901760
      %704 = vmatpush.msra.mxu0 %v703
      %v705 = vand.u32 %v315, 4294901760
      %706 = vmatpush.msra.mxu0 %v705
      %v707 = vand.u32 %v314, 4294901760
      %708 = vmatpush.msra.mxu0 %v707
      %v709 = vand.u32 %v313, 4294901760
      %710 = vmatpush.msra.mxu0 %v709
      %v711 = vand.u32 %v312, 4294901760
      %712 = vmatpush.msra.mxu0 %v711
      %v713 = vand.u32 %v311, 4294901760
      %714 = vmatpush.msra.mxu0 %v713
      %v715 = vand.u32 %v310, 4294901760
      %716 = vmatpush.msra.mxu0 %v715
      %v717 = vand.u32 %v309, 4294901760
      %718 = vmatpush.msra.mxu0 %v717
      %v719 = vand.u32 %v308, 4294901760
      %720 = vmatpush.msra.mxu0 %v719
      %v721 = vand.u32 %v307, 4294901760
      %722 = vmatpush.msra.mxu0 %v721
      %v723 = vand.u32 %v306, 4294901760
      %724 = vmatpush.msra.mxu0 %v723
      %v725 = vand.u32 %v305, 4294901760
      %726 = vmatpush.msra.mxu0 %v725
      %v727 = vand.u32 %v304, 4294901760
      %728 = vmatpush.msra.mxu0 %v727
      %v729 = vand.u32 %v303, 4294901760
      %730 = vmatpush.msra.mxu0 %v729
      %v731 = vand.u32 %v355, 4294901760
      %v732 = vsub.f32 %v355, %v731
      %v733 = vand.u32 %v732, 4294901760
      %v734 = vsub.f32 %v732, %v733
      %v735 = vand.u32 %v734, 4294901760
      %736 = vmatmul.f32.gmra.mxu0 %v735
      %v737 = vpop.f32.mrf.mxu0
      %v738 = vadd.f32 %v697, %v737
      %739 = vdwg.mxu0
      %v740 = vand.u32 %v318, 4294901760
      %v741 = vsub.f32 %v318, %v740
      %v742 = vand.u32 %v741, 4294901760
      %v743 = vsub.f32 %v741, %v742
      %v744 = vand.u32 %v743, 4294901760
      %745 = vmatpush.msra.mxu0 %v744
      %v746 = vand.u32 %v317, 4294901760
      %v747 = vsub.f32 %v317, %v746
      %v748 = vand.u32 %v747, 4294901760
      %v749 = vsub.f32 %v747, %v748
      %v750 = vand.u32 %v749, 4294901760
      %751 = vmatpush.msra.mxu0 %v750
      %v752 = vand.u32 %v316, 4294901760
      %v753 = vsub.f32 %v316, %v752
      %v754 = vand.u32 %v753, 4294901760
      %v755 = vsub.f32 %v753, %v754
      %v756 = vand.u32 %v755, 4294901760
      %757 = vmatpush.msra.mxu0 %v756
      %v758 = vand.u32 %v315, 4294901760
      %v759 = vsub.f32 %v315, %v758
      %v760 = vand.u32 %v759, 4294901760
      %v761 = vsub.f32 %v759, %v760
      %v762 = vand.u32 %v761, 4294901760
      %763 = vmatpush.msra.mxu0 %v762
      %v764 = vand.u32 %v314, 4294901760
      %v765 = vsub.f32 %v314, %v764
      %v766 = vand.u32 %v765, 4294901760
      %v767 = vsub.f32 %v765, %v766
      %v768 = vand.u32 %v767, 4294901760
      %769 = vmatpush.msra.mxu0 %v768
      %v770 = vand.u32 %v313, 4294901760
      %v771 = vsub.f32 %v313, %v770
      %v772 = vand.u32 %v771, 4294901760
      %v773 = vsub.f32 %v771, %v772
      %v774 = vand.u32 %v773, 4294901760
      %775 = vmatpush.msra.mxu0 %v774
      %v776 = vand.u32 %v312, 4294901760
      %v777 = vsub.f32 %v312, %v776
      %v778 = vand.u32 %v777, 4294901760
      %v779 = vsub.f32 %v777, %v778
      %v780 = vand.u32 %v779, 4294901760
      %781 = vmatpush.msra.mxu0 %v780
      %v782 = vand.u32 %v311, 4294901760
      %v783 = vsub.f32 %v311, %v782
      %v784 = vand.u32 %v783, 4294901760
      %v785 = vsub.f32 %v783, %v784
      %v786 = vand.u32 %v785, 4294901760
      %787 = vmatpush.msra.mxu0 %v786
      %v788 = vand.u32 %v310, 4294901760
      %v789 = vsub.f32 %v310, %v788
      %v790 = vand.u32 %v789, 4294901760
      %v791 = vsub.f32 %v789, %v790
      %v792 = vand.u32 %v791, 4294901760
      %793 = vmatpush.msra.mxu0 %v792
      %v794 = vand.u32 %v309, 4294901760
      %v795 = vsub.f32 %v309, %v794
      %v796 = vand.u32 %v795, 4294901760
      %v797 = vsub.f32 %v795, %v796
      %v798 = vand.u32 %v797, 4294901760
      %799 = vmatpush.msra.mxu0 %v798
      %v800 = vand.u32 %v308, 4294901760
      %v801 = vsub.f32 %v308, %v800
      %v802 = vand.u32 %v801, 4294901760
      %v803 = vsub.f32 %v801, %v802
      %v804 = vand.u32 %v803, 4294901760
      %805 = vmatpush.msra.mxu0 %v804
      %v806 = vand.u32 %v307, 4294901760
      %v807 = vsub.f32 %v307, %v806
      %v808 = vand.u32 %v807, 4294901760
      %v809 = vsub.f32 %v807, %v808
      %v810 = vand.u32 %v809, 4294901760
      %811 = vmatpush.msra.mxu0 %v810
      %v812 = vand.u32 %v306, 4294901760
      %v813 = vsub.f32 %v306, %v812
      %v814 = vand.u32 %v813, 4294901760
      %v815 = vsub.f32 %v813, %v814
      %v816 = vand.u32 %v815, 4294901760
      %817 = vmatpush.msra.mxu0 %v816
      %v818 = vand.u32 %v305, 4294901760
      %v819 = vsub.f32 %v305, %v818
      %v820 = vand.u32 %v819, 4294901760
      %v821 = vsub.f32 %v819, %v820
      %v822 = vand.u32 %v821, 4294901760
      %823 = vmatpush.msra.mxu0 %v822
      %v824 = vand.u32 %v304, 4294901760
      %v825 = vsub.f32 %v304, %v824
      %v826 = vand.u32 %v825, 4294901760
      %v827 = vsub.f32 %v825, %v826
      %v828 = vand.u32 %v827, 4294901760
      %829 = vmatpush.msra.mxu0 %v828
      %v830 = vand.u32 %v303, 4294901760
      %v831 = vsub.f32 %v303, %v830
      %v832 = vand.u32 %v831, 4294901760
      %v833 = vsub.f32 %v831, %v832
      %v834 = vand.u32 %v833, 4294901760
      %835 = vmatpush.msra.mxu0 %v834
      %v836 = vand.u32 %v355, 4294901760
      %837 = vmatmul.f32.gmra.mxu0 %v836
      %v838 = vpop.f32.mrf.mxu0
      %v839 = vadd.f32 %v738, %v838
      %840 = vdwg.mxu0
      %v841 = vand.u32 %v318, 4294901760
      %v842 = vsub.f32 %v318, %v841
      %843 = vmatpush.msra.mxu0 %v842
      %v844 = vand.u32 %v317, 4294901760
      %v845 = vsub.f32 %v317, %v844
      %846 = vmatpush.msra.mxu0 %v845
      %v847 = vand.u32 %v316, 4294901760
      %v848 = vsub.f32 %v316, %v847
      %849 = vmatpush.msra.mxu0 %v848
      %v850 = vand.u32 %v315, 4294901760
      %v851 = vsub.f32 %v315, %v850
      %852 = vmatpush.msra.mxu0 %v851
      %v853 = vand.u32 %v314, 4294901760
      %v854 = vsub.f32 %v314, %v853
      %855 = vmatpush.msra.mxu0 %v854
      %v856 = vand.u32 %v313, 4294901760
      %v857 = vsub.f32 %v313, %v856
      %858 = vmatpush.msra.mxu0 %v857
      %v859 = vand.u32 %v312, 4294901760
      %v860 = vsub.f32 %v312, %v859
      %861 = vmatpush.msra.mxu0 %v860
      %v862 = vand.u32 %v311, 4294901760
      %v863 = vsub.f32 %v311, %v862
      %864 = vmatpush.msra.mxu0 %v863
      %v865 = vand.u32 %v310, 4294901760
      %v866 = vsub.f32 %v310, %v865
      %867 = vmatpush.msra.mxu0 %v866
      %v868 = vand.u32 %v309, 4294901760
      %v869 = vsub.f32 %v309, %v868
      %870 = vmatpush.msra.mxu0 %v869
      %v871 = vand.u32 %v308, 4294901760
      %v872 = vsub.f32 %v308, %v871
      %873 = vmatpush.msra.mxu0 %v872
      %v874 = vand.u32 %v307, 4294901760
      %v875 = vsub.f32 %v307, %v874
      %876 = vmatpush.msra.mxu0 %v875
      %v877 = vand.u32 %v306, 4294901760
      %v878 = vsub.f32 %v306, %v877
      %879 = vmatpush.msra.mxu0 %v878
      %v880 = vand.u32 %v305, 4294901760
      %v881 = vsub.f32 %v305, %v880
      %882 = vmatpush.msra.mxu0 %v881
      %v883 = vand.u32 %v304, 4294901760
      %v884 = vsub.f32 %v304, %v883
      %885 = vmatpush.msra.mxu0 %v884
      %v886 = vand.u32 %v303, 4294901760
      %v887 = vsub.f32 %v303, %v886
      %888 = vmatpush.msra.mxu0 %v887
      %v889 = vand.u32 %v355, 4294901760
      %v890 = vsub.f32 %v355, %v889
      %891 = vmatmul.f32.gmra.mxu0 %v890
      %v892 = vpop.f32.mrf.mxu0
      %v893 = vadd.f32 %v839, %v892
      %894 = vdwg.mxu0
      %v895 = vand.u32 %v318, 4294901760
      %896 = vmatpush.msra.mxu0 %v895
      %v897 = vand.u32 %v317, 4294901760
      %898 = vmatpush.msra.mxu0 %v897
      %v899 = vand.u32 %v316, 4294901760
      %900 = vmatpush.msra.mxu0 %v899
      %v901 = vand.u32 %v315, 4294901760
      %902 = vmatpush.msra.mxu0 %v901
      %v903 = vand.u32 %v314, 4294901760
      %904 = vmatpush.msra.mxu0 %v903
      %v905 = vand.u32 %v313, 4294901760
      %906 = vmatpush.msra.mxu0 %v905
      %v907 = vand.u32 %v312, 4294901760
      %908 = vmatpush.msra.mxu0 %v907
      %v909 = vand.u32 %v311, 4294901760
      %910 = vmatpush.msra.mxu0 %v909
      %v911 = vand.u32 %v310, 4294901760
      %912 = vmatpush.msra.mxu0 %v911
      %v913 = vand.u32 %v309, 4294901760
      %914 = vmatpush.msra.mxu0 %v913
      %v915 = vand.u32 %v308, 4294901760
      %916 = vmatpush.msra.mxu0 %v915
      %v917 = vand.u32 %v307, 4294901760
      %918 = vmatpush.msra.mxu0 %v917
      %v919 = vand.u32 %v306, 4294901760
      %920 = vmatpush.msra.mxu0 %v919
      %v921 = vand.u32 %v305, 4294901760
      %922 = vmatpush.msra.mxu0 %v921
      %v923 = vand.u32 %v304, 4294901760
      %924 = vmatpush.msra.mxu0 %v923
      %v925 = vand.u32 %v303, 4294901760
      %926 = vmatpush.msra.mxu0 %v925
      %v927 = vand.u32 %v355, 4294901760
      %v928 = vsub.f32 %v355, %v927
      %v929 = vand.u32 %v928, 4294901760
      %930 = vmatmul.f32.gmra.mxu0 %v929
      %v931 = vpop.f32.mrf.mxu0
      %v932 = vadd.f32 %v893, %v931
      %933 = vdwg.mxu0
      %v934 = vand.u32 %v318, 4294901760
      %v935 = vsub.f32 %v318, %v934
      %v936 = vand.u32 %v935, 4294901760
      %937 = vmatpush.msra.mxu0 %v936
      %v938 = vand.u32 %v317, 4294901760
      %v939 = vsub.f32 %v317, %v938
      %v940 = vand.u32 %v939, 4294901760
      %941 = vmatpush.msra.mxu0 %v940
      %v942 = vand.u32 %v316, 4294901760
      %v943 = vsub.f32 %v316, %v942
      %v944 = vand.u32 %v943, 4294901760
      %945 = vmatpush.msra.mxu0 %v944
      %v946 = vand.u32 %v315, 4294901760
      %v947 = vsub.f32 %v315, %v946
      %v948 = vand.u32 %v947, 4294901760
      %949 = vmatpush.msra.mxu0 %v948
      %v950 = vand.u32 %v314, 4294901760
      %v951 = vsub.f32 %v314, %v950
      %v952 = vand.u32 %v951, 4294901760
      %953 = vmatpush.msra.mxu0 %v952
      %v954 = vand.u32 %v313, 4294901760
      %v955 = vsub.f32 %v313, %v954
      %v956 = vand.u32 %v955, 4294901760
      %957 = vmatpush.msra.mxu0 %v956
      %v958 = vand.u32 %v312, 4294901760
      %v959 = vsub.f32 %v312, %v958
      %v960 = vand.u32 %v959, 4294901760
      %961 = vmatpush.msra.mxu0 %v960
      %v962 = vand.u32 %v311, 4294901760
      %v963 = vsub.f32 %v311, %v962
      %v964 = vand.u32 %v963, 4294901760
      %965 = vmatpush.msra.mxu0 %v964
      %v966 = vand.u32 %v310, 4294901760
      %v967 = vsub.f32 %v310, %v966
      %v968 = vand.u32 %v967, 4294901760
      %969 = vmatpush.msra.mxu0 %v968
      %v970 = vand.u32 %v309, 4294901760
      %v971 = vsub.f32 %v309, %v970
      %v972 = vand.u32 %v971, 4294901760
      %973 = vmatpush.msra.mxu0 %v972
      %v974 = vand.u32 %v308, 4294901760
      %v975 = vsub.f32 %v308, %v974
      %v976 = vand.u32 %v975, 4294901760
      %977 = vmatpush.msra.mxu0 %v976
      %v978 = vand.u32 %v307, 4294901760
      %v979 = vsub.f32 %v307, %v978
      %v980 = vand.u32 %v979, 4294901760
      %981 = vmatpush.msra.mxu0 %v980
      %v982 = vand.u32 %v306, 4294901760
      %v983 = vsub.f32 %v306, %v982
      %v984 = vand.u32 %v983, 4294901760
      %985 = vmatpush.msra.mxu0 %v984
      %v986 = vand.u32 %v305, 4294901760
      %v987 = vsub.f32 %v305, %v986
      %v988 = vand.u32 %v987, 4294901760
      %989 = vmatpush.msra.mxu0 %v988
      %v990 = vand.u32 %v304, 4294901760
      %v991 = vsub.f32 %v304, %v990
      %v992 = vand.u32 %v991, 4294901760
      %993 = vmatpush.msra.mxu0 %v992
      %v994 = vand.u32 %v303, 4294901760
      %v995 = vsub.f32 %v303, %v994
      %v996 = vand.u32 %v995, 4294901760
      %997 = vmatpush.msra.mxu0 %v996
      %v998 = vand.u32 %v355, 4294901760
      %999 = vmatmul.f32.gmra.mxu0 %v998
      %v1000 = vpop.f32.mrf.mxu0
      %v1001 = vadd.f32 %v932, %v1000
      %1002 = vdwg.mxu0
      %v1003 = vand.u32 %v318, 4294901760
      %1004 = vmatpush.msra.mxu0 %v1003
      %v1005 = vand.u32 %v317, 4294901760
      %1006 = vmatpush.msra.mxu0 %v1005
      %v1007 = vand.u32 %v316, 4294901760
      %1008 = vmatpush.msra.mxu0 %v1007
      %v1009 = vand.u32 %v315, 4294901760
      %1010 = vmatpush.msra.mxu0 %v1009
      %v1011 = vand.u32 %v314, 4294901760
      %1012 = vmatpush.msra.mxu0 %v1011
      %v1013 = vand.u32 %v313, 4294901760
      %1014 = vmatpush.msra.mxu0 %v1013
      %v1015 = vand.u32 %v312, 4294901760
      %1016 = vmatpush.msra.mxu0 %v1015
      %v1017 = vand.u32 %v311, 4294901760
      %1018 = vmatpush.msra.mxu0 %v1017
      %v1019 = vand.u32 %v310, 4294901760
      %1020 = vmatpush.msra.mxu0 %v1019
      %v1021 = vand.u32 %v309, 4294901760
      %1022 = vmatpush.msra.mxu0 %v1021
      %v1023 = vand.u32 %v308, 4294901760
      %1024 = vmatpush.msra.mxu0 %v1023
      %v1025 = vand.u32 %v307, 4294901760
      %1026 = vmatpush.msra.mxu0 %v1025
      %v1027 = vand.u32 %v306, 4294901760
      %1028 = vmatpush.msra.mxu0 %v1027
      %v1029 = vand.u32 %v305, 4294901760
      %1030 = vmatpush.msra.mxu0 %v1029
      %v1031 = vand.u32 %v304, 4294901760
      %1032 = vmatpush.msra.mxu0 %v1031
      %v1033 = vand.u32 %v303, 4294901760
      %1034 = vmatpush.msra.mxu0 %v1033
      %v1035 = vand.u32 %v355, 4294901760
      %1036 = vmatmul.f32.gmra.mxu0 %v1035
      %v1037 = vpop.f32.mrf.mxu0
      %v1038 = vadd.f32 %v1001, %v1037
      %1039 = vdwg.mxu0
      %v1040 = vmul.f32 %v1038, 0.001953125
      %vm1041 = vcmask 31744
      %1042 = vst.msk [vmem:[%s174] sm:$0xff] %vm1041, %v1040
      %p1043 = scmp.lt.s32.totalorder %s17, 1
      %s1044 = scalar_select %p1043, %s17, 1
      %s1045 = smul.addr %s1044, 8
      %s1046 = scalar_lea.vmem %s2, %s1045
      // Predicated region
      $region29: #{tpu_custom_call.1} parent=27 // pred_check
        %p1047 = pneg %p92
      $region30: #{tpu_custom_call.1} parent=27 // pred_check_branch
        %1049 = sbr.rel (%p1047) target = $region32
      $region31: #{tpu_custom_call.1} parent=27 // pred_region
        _
      $region32: #{tpu_custom_call.1} parent=27 // pred_fallthru
        _
    $region28: #{tpu_custom_call.1} parent=5 // pred_fallthru
      _
    %p1050 = scmp.le.s32.totalorder 2, %s8
    // Predicated region
    $region33: #{tpu_custom_call.1} parent=5 // pred_check
      %p1051 = pneg %p1050
    $region34: #{tpu_custom_call.1} parent=5 // pred_check_branch
      %1053 = sbr.rel (%p1051) target = $region36
    $region35: #{tpu_custom_call.1} parent=5 // pred_region
      %s1054 = ssub.s32 %s8, 2
      // Predicated region
      $region37: #{tpu_custom_call.1} parent=35 // pred_check
        %p1055 = pneg %p98
      $region38: #{tpu_custom_call.1} parent=35 // pred_check_branch
        %1057 = sbr.rel (%p1055) target = $region40
      $region39: #{tpu_custom_call.1} parent=35 // pred_region
        %p1058 = scmp.lt.s32.totalorder %s19, 1
        %s1059 = scalar_select %p1058, %s19, 1
        %s1060 = smul.addr %s1059, 8
        %s1061 = scalar_lea.vmem %s2, %s1060
      $region40: #{tpu_custom_call.1} parent=35 // pred_fallthru
        _
    $region36: #{tpu_custom_call.1} parent=5 // pred_fallthru
      _
  $region6: #{tpu_custom_call.1} parent=0 // loop_footer
    %s12 = sadd.s32 1, %s8
  $region7: #{tpu_custom_call.1} parent=0 // loop_footer_branch
    %7 = sbr.rel target = $region3
  $region8: #{tpu_custom_call.1} parent=0 // loop_exit
    _

</llo_original>
